<compile_context>
chip_gen: v7x
topology: tpu7x:2x2x1
jax: 0.10.0
libtpu: 0.0.40
codegen_flags: <defaults>
</compile_context>

<pallas_src>
import functools

import jax
import jax.numpy as jnp
from jax.experimental import pallas as pl
from jax.experimental.pallas import tpu as pltpu


def _detect_parts_kernel(x_ref, wblk_ref, mgrp_ref, beff_ref, g_ref, beta_ref,
                         o_ref, *, eps):
    # x_ref:    (d_depth, TM, d_emb)           -- native layout, no wrapper transpose
    # wblk_ref: (d_depth*d_emb, d_depth*d_inp) -- block-diagonal W^T (one block/depth)
    # mgrp_ref: (d_depth*d_inp, d_depth*d_inp) -- per-depth group-averaging matrix
    # beff_ref: (1, d_depth*d_inp)             -- bias with depth_emb pre-folded in
    # g_ref/beta_ref: (1, d_depth*d_inp)       -- LN gamma / beta, tiled per depth
    # o_ref:    (TM, d_depth*d_inp)            -- lane-dense output block
    d_depth = x_ref.shape[0]

    # Fold depth onto lanes: (TM, d_depth*d_emb). Small static lane concat (XLU slack).
    x_cat = jnp.concatenate([x_ref[d] for d in range(d_depth)], axis=-1)

    # All-depth Linear as one lane-dense MXU pass; depth_emb already folded into beff.
    h = jnp.dot(x_cat, wblk_ref[...], preferred_element_type=jnp.float32) + beff_ref[...]

    # Swish: x * sigmoid(x)  (sigmoid goes to the EUP slot).
    h = h * jax.nn.sigmoid(h)

    # Per-depth LayerNorm over its own d_inp lanes.  Both stat matmuls depend only on
    # h, so they stream back-to-back through the MXU (no serial dependency on mean).
    mean = jnp.dot(h, mgrp_ref[...], preferred_element_type=jnp.float32)
    ex2 = jnp.dot(h * h, mgrp_ref[...], preferred_element_type=jnp.float32)
    var = jnp.maximum(ex2 - mean * mean, 0.0)      # guard tiny negative cancellation
    y = (h - mean) * jax.lax.rsqrt(var + eps)
    o_ref[...] = (y * g_ref[...] + beta_ref[...]).astype(o_ref.dtype)


def detect_parts_forward(x, depth_emb, w, b, ln_gamma, ln_beta, *, eps=1e-5,
                         tile_m=4096):
    """x: (d_depth, B, T, d_emb) float32. Returns (B, T*d_depth, d_inp)."""
    d_depth, B, T, d_emb = x.shape
    d_inp = w.shape[0]
    rows = B * T
    di = d_depth * d_emb   # folded input width  (128 for d_depth=4, d_emb=32)
    do = d_depth * d_inp   # folded output width (128 for d_depth=4, d_inp=32)

    def cdiv(a, m):
        return -(-a // m)

    def rup(a, m):
        return cdiv(a, m) * m

    # Free reshape of the native layout (no HBM transpose pass).
    x3 = x.reshape(d_depth, rows, d_emb)

    # Small constants, built once in the wrapper.
    w_blk = jnp.kron(jnp.eye(d_depth, dtype=w.dtype), jnp.transpose(w))        # (di, do)
    m_grp = jnp.kron(jnp.eye(d_depth, dtype=x.dtype),
                     jnp.full((d_inp, d_inp), 1.0 / d_inp, dtype=x.dtype))     # (do, do)
    # (x + e) @ Wblk + b == x @ Wblk + (e @ Wblk + b): fold depth_emb into the bias.
    b_eff = (depth_emb.reshape(1, di) @ w_blk
             + jnp.tile(b, d_depth).reshape(1, do))                            # (1, do)
    g_t = jnp.tile(ln_gamma, d_depth).reshape(1, do)
    beta_t = jnp.tile(ln_beta, d_depth).reshape(1, do)

    # ---- Tile selection (review items 1, 2, 5) ----------------------------------
    # VMEM bytes per tiled row (double-buffered x block is lane-padded d_emb->128,
    # double-buffered output, plus headroom for live f32 temps in the kernel body).
    lane = 128
    bytes_per_row = (2 * d_depth * rup(d_emb, lane) * 4      # x input, 2 buffers
                     + 2 * rup(do, lane) * 4                 # output, 2 buffers
                     + 8 * rup(max(di, do), lane) * 4)       # live temps headroom
    vmem_budget = 44 * 1024 * 1024          # conservative for v7x (64 MiB physical)
    tm_cap = max(8, (vmem_budget // bytes_per_row) // 8 * 8)

    tile_m = max(8, int(tile_m))
    n_tiles = cdiv(rows, min(tile_m, tm_cap))
    if n_tiles > 1 and n_tiles % 2:
        n_tiles += 1                        # even split across v7x's 2 TensorCores
    tm = min(rup(cdiv(rows, n_tiles), 8), tm_cap)   # balanced: no tiny trailing tile
    n_tiles = cdiv(rows, tm)

    # Explicit scoped-VMEM limit: above v5e's 16 MiB default, below v7x's 64 MiB.
    vmem_limit = int(min(56 * 2**20,
                         max(32 * 2**20, bytes_per_row * tm + (8 << 20))))

    out = pl.pallas_call(
        functools.partial(_detect_parts_kernel, eps=eps),
        out_shape=jax.ShapeDtypeStruct((rows, do), x.dtype),
        grid_spec=pltpu.PrefetchScalarGridSpec(
            num_scalar_prefetch=0,
            grid=(n_tiles,),
            in_specs=[
                pl.BlockSpec((d_depth, tm, d_emb), lambda i: (0, i, 0)),
                pl.BlockSpec((di, do), lambda i: (0, 0)),
                pl.BlockSpec((do, do), lambda i: (0, 0)),
                pl.BlockSpec((1, do), lambda i: (0, 0)),
                pl.BlockSpec((1, do), lambda i: (0, 0)),
                pl.BlockSpec((1, do), lambda i: (0, 0)),
            ],
            out_specs=pl.BlockSpec((tm, do), lambda i: (i, 0)),
        ),
        compiler_params=pltpu.CompilerParams(
            dimension_semantics=("parallel",),
            vmem_limit_bytes=vmem_limit),
    )(x3, w_blk, m_grp, b_eff, g_t, beta_t)

    # (rows, d_depth*d_inp) -> (B, T*d_depth, d_inp): contiguous, free reshape,
    # identical ordering to the torch view+squeeze.
    return out.reshape(B, T * d_depth, d_inp)


def _reference(x, depth_emb, w, b, ln_gamma, ln_beta, eps=1e-5):
    xp = jnp.transpose(x, (1, 2, 0, 3)) + depth_emb           # (B, T, d_depth, d_emb)
    h = jnp.einsum("btld,od->btlo", xp, w) + b
    h = h * jax.nn.sigmoid(h)
    mean = jnp.mean(h, axis=-1, keepdims=True)
    var = jnp.mean((h - mean) ** 2, axis=-1, keepdims=True)
    y = (h - mean) * jax.lax.rsqrt(var + eps) * ln_gamma + ln_beta
    B, T, L, O = y.shape
    return y.reshape(B, T * L, O)


if __name__ == "__main__":
    d_depth, d_emb, d_inp = 4, 32, 32
    B, T = 2, 8

    key = jax.random.PRNGKey(0)
    kx, kw, kd, kb, kg, kbeta = jax.random.split(key, 6)

    # Parameters (learnable in the module; use non-trivial values to exercise all paths).
    depth_emb = 0.1 * jax.random.normal(kd, (d_depth, d_emb), jnp.float32)
    w = jax.random.normal(kw, (d_inp, d_emb), jnp.float32) * jnp.sqrt(2.0 / d_emb)
    b = 0.1 * jax.random.normal(kb, (d_inp,), jnp.float32)
    ln_gamma = 1.0 + 0.1 * jax.random.normal(kg, (d_inp,), jnp.float32)
    ln_beta = 0.1 * jax.random.normal(kbeta, (d_inp,), jnp.float32)

    x = jax.random.normal(kx, (d_depth, B, T, d_emb), jnp.float32)

    y = detect_parts_forward(x, depth_emb, w, b, ln_gamma, ln_beta)
    y = jax.block_until_ready(y)

    y_ref = _reference(x, depth_emb, w, b, ln_gamma, ln_beta)
    assert y.shape == (B, T * d_depth, d_inp), y.shape
    assert jnp.allclose(y, y_ref, atol=1e-4, rtol=1e-4), (
        "mismatch vs reference, max abs err = "
        f"{float(jnp.max(jnp.abs(y - y_ref)))}")

    print("KERNEL_OK")
</pallas_src>

<mosaic_0001>
module attributes {stable_mosaic.version = 11 : i64} {
  func.func @_detect_parts_kernel(%arg0: i32, %arg1: memref<4x16x32xf32, #tpu.memory_space<vmem>>, %arg2: memref<128x128xf32, #tpu.memory_space<vmem>>, %arg3: memref<128x128xf32, #tpu.memory_space<vmem>>, %arg4: memref<1x128xf32, #tpu.memory_space<vmem>>, %arg5: memref<1x128xf32, #tpu.memory_space<vmem>>, %arg6: memref<1x128xf32, #tpu.memory_space<vmem>>, %arg7: memref<16x128xf32, #tpu.memory_space<vmem>>) attributes {dimension_semantics = [#tpu.dimension_semantics<parallel>], iteration_bounds = array<i64: 1>, scalar_prefetch = 0 : i64, scratch_operands = 0 : i64, tpu.core_type = #tpu.core_type<tc>, window_params = [{transform_indices = @transform_0, window_bounds = array<i64: 4, 16, 32>}, {pipeline_mode = #tpu.pipeline_mode<synchronous>, transform_indices = @transform_1, window_bounds = array<i64: 128, 128>}, {pipeline_mode = #tpu.pipeline_mode<synchronous>, transform_indices = @transform_2, window_bounds = array<i64: 128, 128>}, {pipeline_mode = #tpu.pipeline_mode<synchronous>, transform_indices = @transform_3, window_bounds = array<i64: 1, 128>}, {pipeline_mode = #tpu.pipeline_mode<synchronous>, transform_indices = @transform_4, window_bounds = array<i64: 1, 128>}, {pipeline_mode = #tpu.pipeline_mode<synchronous>, transform_indices = @transform_5, window_bounds = array<i64: 1, 128>}, {transform_indices = @transform_6, window_bounds = array<i64: 16, 128>}]} {
    %c0 = arith.constant 0 : index
    %c0_0 = arith.constant 0 : index
    %c0_1 = arith.constant 0 : index
    %0 = vector.load %arg1[%c0, %c0_0, %c0_1] : memref<4x16x32xf32, #tpu.memory_space<vmem>>, vector<1x16x32xf32>
    %1 = vector.shape_cast %0 : vector<1x16x32xf32> to vector<16x32xf32>
    %c1 = arith.constant 1 : index
    %c0_2 = arith.constant 0 : index
    %c0_3 = arith.constant 0 : index
    %2 = vector.load %arg1[%c1, %c0_2, %c0_3] : memref<4x16x32xf32, #tpu.memory_space<vmem>>, vector<1x16x32xf32>
    %3 = vector.shape_cast %2 : vector<1x16x32xf32> to vector<16x32xf32>
    %c2 = arith.constant 2 : index
    %c0_4 = arith.constant 0 : index
    %c0_5 = arith.constant 0 : index
    %4 = vector.load %arg1[%c2, %c0_4, %c0_5] : memref<4x16x32xf32, #tpu.memory_space<vmem>>, vector<1x16x32xf32>
    %5 = vector.shape_cast %4 : vector<1x16x32xf32> to vector<16x32xf32>
    %c3 = arith.constant 3 : index
    %c0_6 = arith.constant 0 : index
    %c0_7 = arith.constant 0 : index
    %6 = vector.load %arg1[%c3, %c0_6, %c0_7] : memref<4x16x32xf32, #tpu.memory_space<vmem>>, vector<1x16x32xf32>
    %7 = vector.shape_cast %6 : vector<1x16x32xf32> to vector<16x32xf32>
    %8 = tpu.concatenate %1, %3, %5, %7 in 1 : vector<16x32xf32>, vector<16x32xf32>, vector<16x32xf32>, vector<16x32xf32> -> vector<16x128xf32>
    %c0_8 = arith.constant 0 : index
    %c0_9 = arith.constant 0 : index
    %9 = vector.load %arg2[%c0_8, %c0_9] : memref<128x128xf32, #tpu.memory_space<vmem>>, vector<128x128xf32>
    %cst = arith.constant dense<0.000000e+00> : vector<16x128xf32>
    %10 = tpu.matmul %8, %9, %cst {dimension_numbers = #tpu.dot_dimension_numbers<[1], [0], [0], [1], [0, 0, 1, 1], [], []>} : vector<16x128xf32>, vector<128x128xf32>, vector<16x128xf32> -> vector<16x128xf32>
    %c0_10 = arith.constant 0 : index
    %c0_11 = arith.constant 0 : index
    %11 = vector.load %arg4[%c0_10, %c0_11] : memref<1x128xf32, #tpu.memory_space<vmem>>, vector<1x128xf32>
    %12 = vector.broadcast %11 : vector<1x128xf32> to vector<16x128xf32>
    %13 = arith.addf %10, %12 : vector<16x128xf32>
    %14 = arith.negf %13 : vector<16x128xf32>
    %15 = math.exp %14 : vector<16x128xf32>
    %cst_12 = arith.constant 1.000000e+00 : f32
    %16 = vector.broadcast %cst_12 : f32 to vector<16x128xf32>
    %17 = arith.addf %16, %15 : vector<16x128xf32>
    %18 = arith.divf %16, %17 : vector<16x128xf32>
    %19 = arith.mulf %13, %18 : vector<16x128xf32>
    %c0_13 = arith.constant 0 : index
    %c0_14 = arith.constant 0 : index
    %20 = vector.load %arg3[%c0_13, %c0_14] : memref<128x128xf32, #tpu.memory_space<vmem>>, vector<128x128xf32>
    %cst_15 = arith.constant dense<0.000000e+00> : vector<16x128xf32>
    %21 = tpu.matmul %19, %20, %cst_15 {dimension_numbers = #tpu.dot_dimension_numbers<[1], [0], [0], [1], [0, 0, 1, 1], [], []>} : vector<16x128xf32>, vector<128x128xf32>, vector<16x128xf32> -> vector<16x128xf32>
    %22 = arith.mulf %19, %19 : vector<16x128xf32>
    %c0_16 = arith.constant 0 : index
    %c0_17 = arith.constant 0 : index
    %23 = vector.load %arg3[%c0_16, %c0_17] : memref<128x128xf32, #tpu.memory_space<vmem>>, vector<128x128xf32>
    %cst_18 = arith.constant dense<0.000000e+00> : vector<16x128xf32>
    %24 = tpu.matmul %22, %23, %cst_18 {dimension_numbers = #tpu.dot_dimension_numbers<[1], [0], [0], [1], [0, 0, 1, 1], [], []>} : vector<16x128xf32>, vector<128x128xf32>, vector<16x128xf32> -> vector<16x128xf32>
    %25 = arith.mulf %21, %21 : vector<16x128xf32>
    %26 = arith.subf %24, %25 : vector<16x128xf32>
    %cst_19 = arith.constant 0.000000e+00 : f32
    %27 = vector.broadcast %cst_19 : f32 to vector<16x128xf32>
    %28 = arith.maximumf %26, %27 : vector<16x128xf32>
    %29 = arith.subf %19, %21 : vector<16x128xf32>
    %cst_20 = arith.constant 9.99999974E-6 : f32
    %30 = vector.broadcast %cst_20 : f32 to vector<16x128xf32>
    %31 = arith.addf %28, %30 : vector<16x128xf32>
    %32 = math.rsqrt %31 : vector<16x128xf32>
    %33 = arith.mulf %29, %32 : vector<16x128xf32>
    %c0_21 = arith.constant 0 : index
    %c0_22 = arith.constant 0 : index
    %34 = vector.load %arg5[%c0_21, %c0_22] : memref<1x128xf32, #tpu.memory_space<vmem>>, vector<1x128xf32>
    %35 = vector.broadcast %34 : vector<1x128xf32> to vector<16x128xf32>
    %36 = arith.mulf %33, %35 : vector<16x128xf32>
    %c0_23 = arith.constant 0 : index
    %c0_24 = arith.constant 0 : index
    %37 = vector.load %arg6[%c0_23, %c0_24] : memref<1x128xf32, #tpu.memory_space<vmem>>, vector<1x128xf32>
    %38 = vector.broadcast %37 : vector<1x128xf32> to vector<16x128xf32>
    %39 = arith.addf %36, %38 : vector<16x128xf32>
    %c0_25 = arith.constant 0 : index
    %c0_26 = arith.constant 0 : index
    %40 = vector.load %arg7[%c0_25, %c0_26] : memref<16x128xf32, #tpu.memory_space<vmem>>, vector<16x128xf32>
    tpu.vector_store %arg7[%c0_25, %c0_26], %39 {strides = array<i32>} : memref<16x128xf32, #tpu.memory_space<vmem>>, vector<16x128xf32>,
    return
  }
  func.func @transform_0(%arg0: i32) -> (i32, i32, i32) {
    %c0_i32 = arith.constant 0 : i32
    %c0_i32_0 = arith.constant 0 : i32
    %c0_i32_1 = arith.constant 0 : i32
    return %c0_i32, %arg0, %c0_i32_0 : i32, i32, i32
  }
  func.func @transform_1(%arg0: i32) -> (i32, i32) {
    %c0_i32 = arith.constant 0 : i32
    %c0_i32_0 = arith.constant 0 : i32
    %c0_i32_1 = arith.constant 0 : i32
    return %c0_i32, %c0_i32_0 : i32, i32
  }
  func.func @transform_2(%arg0: i32) -> (i32, i32) {
    %c0_i32 = arith.constant 0 : i32
    %c0_i32_0 = arith.constant 0 : i32
    %c0_i32_1 = arith.constant 0 : i32
    return %c0_i32, %c0_i32_0 : i32, i32
  }
  func.func @transform_3(%arg0: i32) -> (i32, i32) {
    %c0_i32 = arith.constant 0 : i32
    %c0_i32_0 = arith.constant 0 : i32
    %c0_i32_1 = arith.constant 0 : i32
    return %c0_i32, %c0_i32_0 : i32, i32
  }
  func.func @transform_4(%arg0: i32) -> (i32, i32) {
    %c0_i32 = arith.constant 0 : i32
    %c0_i32_0 = arith.constant 0 : i32
    %c0_i32_1 = arith.constant 0 : i32
    return %c0_i32, %c0_i32_0 : i32, i32
  }
  func.func @transform_5(%arg0: i32) -> (i32, i32) {
    %c0_i32 = arith.constant 0 : i32
    %c0_i32_0 = arith.constant 0 : i32
    %c0_i32_1 = arith.constant 0 : i32
    return %c0_i32, %c0_i32_0 : i32, i32
  }
  func.func @transform_6(%arg0: i32) -> (i32, i32) {
    %c0_i32 = arith.constant 0 : i32
    %c0_i32_0 = arith.constant 0 : i32
    return %arg0, %c0_i32 : i32, i32
  }
}

</mosaic_0001>

<llo_original>
// kernel: tpu_custom_call.1
$region0: #{tpu_custom_call.1}
  #allocation0 [shape = 'u32[]', space=smem, size = 0x4, offset = 0x4, fixed_abs, tag = 'smem constant byte address 0x4 - core index']
  #allocation1 [shape = 'u32[144,128]{1,0:T(1,128)}', space=vmem, size = 0x12000, scoped, tag = 'internal scratch']
  %s0 = inlined_call_operand.hbm [shape: f32[4,16,32], index: 0, kind: input, shape index: {}]
  %s1 = inlined_call_operand.hbm [shape: f32[128,128], index: 1, kind: input, shape index: {}]
  %s2 = inlined_call_operand.hbm [shape: f32[128,128], index: 2, kind: input, shape index: {}]
  %s3 = inlined_call_operand.vmem [shape: f32[1,128], index: 3, kind: input, shape index: {}]
  %s4 = inlined_call_operand.vmem [shape: f32[1,128], index: 4, kind: input, shape index: {}]
  %s5 = inlined_call_operand.vmem [shape: f32[1,128], index: 5, kind: input, shape index: {}]
  %s6 = inlined_call_operand.hbm [shape: f32[16,128], index: 6, kind: output, shape index: {}]
  %s7 = sld [smem:[#allocation0]]
  $region46: #{tpu_custom_call.1} parent=0
    _
  %s9 = ssub.s32 1, %s7
  %s10 = scalar_select 0, %s9, %s7
  $region1: #{tpu_custom_call.1} parent=0
    #allocation2 [shape = 'u8[32768]{0}', space=vmem, size = 0x8000, scoped, tag = 'input window, operand 0, single buffered']
    #allocation3 [shape = 's32[1]{0}', space=sflag, size = 0x4, scoped, tag = 'scoped memory for tpu_custom_call.1']
    #allocation4 [shape = 's32[1]{0}', space=sflag, size = 0x4, scoped, tag = 'scoped memory for tpu_custom_call.1']
    #allocation5 [shape = 'u8[65536]{0}', space=vmem, size = 0x10000, scoped, tag = 'input window, operand 1, single buffered']
    #allocation6 [shape = 's32[1]{0}', space=sflag, size = 0x4, scoped, tag = 'scoped memory for tpu_custom_call.1']
    #allocation7 [shape = 'u8[65536]{0}', space=vmem, size = 0x10000, scoped, tag = 'input window, operand 2, single buffered']
    #allocation8 [shape = 'u8[8192]{0}', space=vmem, size = 0x2000, scoped, tag = 'output window, operand 0, single buffered']
    %11 = vsyncpa [#allocation3], 0
    %12 = vsyncpa [#allocation6], 0
    %13 = vsyncpa [#allocation4], 0
    // Predicated region
    $region2: #{tpu_custom_call.1} parent=1 // pred_check
      _
    $region3: #{tpu_custom_call.1} parent=1 // pred_check_branch
      %15 = sbr.rel (0) target = $region5
    $region4: #{tpu_custom_call.1} parent=1 // pred_region
      %s17 = ssub.s32 1024, 1024
      %18 = vsyncadd [#allocation3], %s17
      %s19 = sshll.u32 [#allocation2], 4
      %s20 = int_to_ptr.vmem [resolvable:$true] %s19
      %25 = dma.hbm_to_vmem [thread:$0]  %s0, 1024, %s20, [#allocation3], 128, 128, 8
    $region5: #{tpu_custom_call.1} parent=1 // pred_fallthru
      _
    // Predicated region
    $region6: #{tpu_custom_call.1} parent=1 // pred_check
      _
    $region7: #{tpu_custom_call.1} parent=1 // pred_check_branch
      %27 = sbr.rel (0) target = $region9
    $region8: #{tpu_custom_call.1} parent=1 // pred_region
      %s29 = ssub.s32 2048, 2048
      %30 = vsyncadd [#allocation6], %s29
      %s31 = sshll.u32 [#allocation5], 4
      %s32 = int_to_ptr.vmem [resolvable:$true] %s31
      %37 = dma.hbm_to_vmem [thread:$0]  %s1, 2048, %s32, [#allocation6], 128, 128, 8
    $region9: #{tpu_custom_call.1} parent=1 // pred_fallthru
      _
    // Predicated region
    $region10: #{tpu_custom_call.1} parent=1 // pred_check
      _
    $region11: #{tpu_custom_call.1} parent=1 // pred_check_branch
      %39 = sbr.rel (0) target = $region13
    $region12: #{tpu_custom_call.1} parent=1 // pred_region
      %s41 = ssub.s32 2048, 2048
      %42 = vsyncadd [#allocation6], %s41
      %s43 = sshll.u32 [#allocation7], 4
      %s44 = int_to_ptr.vmem [resolvable:$true] %s43
      %49 = dma.hbm_to_vmem [thread:$0]  %s2, 2048, %s44, [#allocation6], 128, 128, 8
    $region13: #{tpu_custom_call.1} parent=1 // pred_fallthru
      _
    // Predicated region
    $region14: #{tpu_custom_call.1} parent=1 // pred_check
      _
    $region15: #{tpu_custom_call.1} parent=1 // pred_check_branch
      %51 = sbr.rel (0) target = $region17
    $region16: #{tpu_custom_call.1} parent=1 // pred_region
      _
    $region17: #{tpu_custom_call.1} parent=1 // pred_fallthru
      _
    // Predicated region
    $region18: #{tpu_custom_call.1} parent=1 // pred_check
      _
    $region19: #{tpu_custom_call.1} parent=1 // pred_check_branch
      %53 = sbr.rel (0) target = $region21
    $region20: #{tpu_custom_call.1} parent=1 // pred_region
      _
    $region21: #{tpu_custom_call.1} parent=1 // pred_fallthru
      _
    // Predicated region
    $region22: #{tpu_custom_call.1} parent=1 // pred_check
      _
    $region23: #{tpu_custom_call.1} parent=1 // pred_check_branch
      %55 = sbr.rel (0) target = $region25
    $region24: #{tpu_custom_call.1} parent=1 // pred_region
      _
    $region25: #{tpu_custom_call.1} parent=1 // pred_fallthru
      _
    // Predicated region
    $region26: #{tpu_custom_call.1} parent=1 // pred_check
      _
    $region27: #{tpu_custom_call.1} parent=1 // pred_check_branch
      %57 = sbr.rel (0) target = $region29
    $region28: #{tpu_custom_call.1} parent=1 // pred_region
      %58 = dma.done [#allocation3], 1024
    $region29: #{tpu_custom_call.1} parent=1 // pred_fallthru
      _
    // Predicated region
    $region30: #{tpu_custom_call.1} parent=1 // pred_check
      _
    $region31: #{tpu_custom_call.1} parent=1 // pred_check_branch
      %60 = sbr.rel (0) target = $region33
    $region32: #{tpu_custom_call.1} parent=1 // pred_region
      %61 = dma.done [#allocation6], 2048
    $region33: #{tpu_custom_call.1} parent=1 // pred_fallthru
      _
    // Predicated region
    $region34: #{tpu_custom_call.1} parent=1 // pred_check
      _
    $region35: #{tpu_custom_call.1} parent=1 // pred_check_branch
      %63 = sbr.rel (0) target = $region37
    $region36: #{tpu_custom_call.1} parent=1 // pred_region
      %64 = dma.done [#allocation6], 2048
    $region37: #{tpu_custom_call.1} parent=1 // pred_fallthru
      _
    %v65 = vld [vmem:[#allocation2] sm:$0xff]
    %v66 = vld [vmem:[#allocation2 + $0x8] sm:$0xff]
    %s67 = scalar_lea.vmem [#allocation2], 16
    %v68 = vld [vmem:[%s67] sm:$0xff]
    %v69 = vld [vmem:[%s67 + $0x8] sm:$0xff]
    %s70 = scalar_lea.vmem [#allocation2], 32
    %v71 = vld [vmem:[%s70] sm:$0xff]
    %v72 = vld [vmem:[%s70 + $0x8] sm:$0xff]
    %s73 = scalar_lea.vmem [#allocation2], 48
    %v74 = vld [vmem:[%s73] sm:$0xff]
    %v75 = vld [vmem:[%s73 + $0x8] sm:$0xff]
    %78 = vrot.lane.b32.xlu0 %v68, 32
    %v79 = vpop.permute.xlu0 %78
    %80 = vrot.lane.b32.xlu0 %v69, 32
    %v81 = vpop.permute.xlu0 %80
    %86 = vrot.lane.b32.xlu0 %v71, 64
    %v87 = vpop.permute.xlu0 %86
    %88 = vrot.lane.b32.xlu0 %v72, 64
    %v89 = vpop.permute.xlu0 %88
    %94 = vrot.lane.b32.xlu0 %v74, 96
    %v95 = vpop.permute.xlu0 %94
    %96 = vrot.lane.b32.xlu0 %v75, 96
    %v97 = vpop.permute.xlu0 %96
    %vm100 = vcmask 261120
    %v101 = vsel %vm100, %v65, %v79
    %v102 = vsel %vm100, %v66, %v81
    %vm103 = vcmask 523264
    %v104 = vsel %vm103, %v101, %v87
    %v105 = vsel %vm103, %v102, %v89
    %vm106 = vcmask 785408
    %v107 = vsel %vm106, %v104, %v95
    %v108 = vsel %vm106, %v105, %v97
    %v109 = vld [vmem:[#allocation5] sm:$0xff]
    %v110 = vld [vmem:[#allocation5 + $0x8] sm:$0xff]
    %v111 = vld [vmem:[#allocation5 + $0x10] sm:$0xff]
    %v112 = vld [vmem:[#allocation5 + $0x18] sm:$0xff]
    %v113 = vld [vmem:[#allocation5 + $0x20] sm:$0xff]
    %v114 = vld [vmem:[#allocation5 + $0x28] sm:$0xff]
    %v115 = vld [vmem:[#allocation5 + $0x30] sm:$0xff]
    %v116 = vld [vmem:[#allocation5 + $0x38] sm:$0xff]
    %v117 = vld [vmem:[#allocation5 + $0x40] sm:$0xff]
    %v118 = vld [vmem:[#allocation5 + $0x48] sm:$0xff]
    %v119 = vld [vmem:[#allocation5 + $0x50] sm:$0xff]
    %v120 = vld [vmem:[#allocation5 + $0x58] sm:$0xff]
    %v121 = vld [vmem:[#allocation5 + $0x60] sm:$0xff]
    %v122 = vld [vmem:[#allocation5 + $0x68] sm:$0xff]
    %v123 = vld [vmem:[#allocation5 + $0x70] sm:$0xff]
    %v124 = vld [vmem:[#allocation5 + $0x78] sm:$0xff]
    %v125 = vld [vmem:[%s3] sm:$0x1]
    %v127 = vlaneseq
    %v128 = vshrl.u32 %v127, 7
    %v129 = vsub.s32 0, %v128
    %v130 = vrot.slane %v125, %v129
    %132 = vmatprep.subr.mxu0 0.0
    %133 = vmatpush1.msra.mxu0 %v109
    %134 = vmatprep.subr.mxu0 0.0
    %135 = vmatpush1.msra.mxu0 %v110
    %136 = vmatprep.subr.mxu0 0.0
    %137 = vmatpush1.msra.mxu0 %v111
    %138 = vmatprep.subr.mxu0 0.0
    %139 = vmatpush1.msra.mxu0 %v112
    %140 = vmatprep.subr.mxu0 0.0
    %141 = vmatpush1.msra.mxu0 %v113
    %142 = vmatprep.subr.mxu0 0.0
    %143 = vmatpush1.msra.mxu0 %v114
    %144 = vmatprep.subr.mxu0 0.0
    %145 = vmatpush1.msra.mxu0 %v115
    %146 = vmatprep.subr.mxu0 0.0
    %147 = vmatpush1.msra.mxu0 %v116
    %148 = vmatprep.subr.mxu0 0.0
    %149 = vmatpush1.msra.mxu0 %v117
    %150 = vmatprep.subr.mxu0 0.0
    %151 = vmatpush1.msra.mxu0 %v118
    %152 = vmatprep.subr.mxu0 0.0
    %153 = vmatpush1.msra.mxu0 %v119
    %154 = vmatprep.subr.mxu0 0.0
    %155 = vmatpush1.msra.mxu0 %v120
    %156 = vmatprep.subr.mxu0 0.0
    %157 = vmatpush1.msra.mxu0 %v121
    %158 = vmatprep.subr.mxu0 0.0
    %159 = vmatpush1.msra.mxu0 %v122
    %160 = vmatprep.subr.mxu0 0.0
    %161 = vmatpush1.msra.mxu0 %v123
    %162 = vmatprep.subr.mxu0 0.0
    %163 = vmatpush1.msra.mxu0 %v124
    %164 = vmatprep.subr.mxu0 0.0
    %165 = vmatpush1.msra.mxu0 0.0
    %166 = vmatprep.subr.mxu0 0.0
    %167 = vmatpush1.msra.mxu0 0.0
    %168 = vmatprep.subr.mxu0 0.0
    %169 = vmatpush1.msra.mxu0 0.0
    %170 = vmatprep.subr.mxu0 0.0
    %171 = vmatpush1.msra.mxu0 0.0
    %172 = vmatprep.subr.mxu0 0.0
    %173 = vmatpush1.msra.mxu0 0.0
    %174 = vmatprep.subr.mxu0 0.0
    %175 = vmatpush1.msra.mxu0 0.0
    %176 = vmatprep.subr.mxu0 0.0
    %177 = vmatpush1.msra.mxu0 0.0
    %178 = vmatprep.subr.mxu0 0.0
    %179 = vmatpush1.msra.mxu0 0.0
    %180 = vmatprep.subr.mxu0 0.0
    %181 = vmatpush1.msra.mxu0 0.0
    %182 = vmatprep.subr.mxu0 0.0
    %183 = vmatpush1.msra.mxu0 0.0
    %184 = vmatprep.subr.mxu0 0.0
    %185 = vmatpush1.msra.mxu0 0.0
    %186 = vmatprep.subr.mxu0 0.0
    %187 = vmatpush1.msra.mxu0 0.0
    %188 = vmatprep.subr.mxu0 0.0
    %189 = vmatpush1.msra.mxu0 0.0
    %190 = vmatprep.subr.mxu0 0.0
    %191 = vmatpush1.msra.mxu0 0.0
    %192 = vmatprep.subr.mxu0 0.0
    %193 = vmatpush1.msra.mxu0 0.0
    %194 = vmatprep.subr.mxu0 0.0
    %195 = vmatpush1.msra.mxu0 0.0
    %196 = vmatprep.mubr.f32.mxu0 0.0
    %197 = vmatmul.mubr.f32.gmra.mrb[0].mxu0 %v107
    %v198 = vpop.f32.mrb[0].mxu0
    %v199 = vadd.f32 %v130, %v198
    %v200 = vpop.f32.mrb[0].mxu0
    %201 = vmatprep.mubr.f32.mxu0 0.0
    %202 = vmatmul.mubr.f32.gmra.mrb[0].mxu0 %v108
    %v203 = vpop.f32.mrb[0].mxu0
    %v204 = vadd.f32 %v130, %v203
    %v205 = vpop.f32.mrb[0].mxu0
    %206 = vdwg.mxu0
    %v207 = vxor.u32 %v199, 2147483648
    %v208 = vxor.u32 %v204, 2147483648
    %v209 = vmul.f32 %v207, 1.442695
    %v210 = vpow.pop %v209
    %v211 = vmul.f32 %v208, 1.442695
    %v212 = vpow.pop %v211
    %v213 = vadd.f32 %v210, 1.0
    %v214 = vadd.f32 %v212, 1.0
    %v215 = vrcp.pop %v213
    %v216 = vmul.f32 1.0, %v215
    %v217 = vrcp.pop %v214
    %v218 = vmul.f32 1.0, %v217
    %v219 = vmul.f32 %v199, %v216
    %v220 = vmul.f32 %v204, %v218
    %v221 = vld [vmem:[#allocation7] sm:$0xff]
    %v222 = vld [vmem:[#allocation7 + $0x8] sm:$0xff]
    %v223 = vld [vmem:[#allocation7 + $0x10] sm:$0xff]
    %v224 = vld [vmem:[#allocation7 + $0x18] sm:$0xff]
    %v225 = vld [vmem:[#allocation7 + $0x20] sm:$0xff]
    %v226 = vld [vmem:[#allocation7 + $0x28] sm:$0xff]
    %v227 = vld [vmem:[#allocation7 + $0x30] sm:$0xff]
    %v228 = vld [vmem:[#allocation7 + $0x38] sm:$0xff]
    %v229 = vld [vmem:[#allocation7 + $0x40] sm:$0xff]
    %v230 = vld [vmem:[#allocation7 + $0x48] sm:$0xff]
    %v231 = vld [vmem:[#allocation7 + $0x50] sm:$0xff]
    %v232 = vld [vmem:[#allocation7 + $0x58] sm:$0xff]
    %v233 = vld [vmem:[#allocation7 + $0x60] sm:$0xff]
    %v234 = vld [vmem:[#allocation7 + $0x68] sm:$0xff]
    %v235 = vld [vmem:[#allocation7 + $0x70] sm:$0xff]
    %v236 = vld [vmem:[#allocation7 + $0x78] sm:$0xff]
    %237 = vmatprep.subr.mxu0 0.0
    %238 = vmatpush1.msra.mxu0 %v221
    %239 = vmatprep.subr.mxu0 0.0
    %240 = vmatpush1.msra.mxu0 %v222
    %241 = vmatprep.subr.mxu0 0.0
    %242 = vmatpush1.msra.mxu0 %v223
    %243 = vmatprep.subr.mxu0 0.0
    %244 = vmatpush1.msra.mxu0 %v224
    %245 = vmatprep.subr.mxu0 0.0
    %246 = vmatpush1.msra.mxu0 %v225
    %247 = vmatprep.subr.mxu0 0.0
    %248 = vmatpush1.msra.mxu0 %v226
    %249 = vmatprep.subr.mxu0 0.0
    %250 = vmatpush1.msra.mxu0 %v227
    %251 = vmatprep.subr.mxu0 0.0
    %252 = vmatpush1.msra.mxu0 %v228
    %253 = vmatprep.subr.mxu0 0.0
    %254 = vmatpush1.msra.mxu0 %v229
    %255 = vmatprep.subr.mxu0 0.0
    %256 = vmatpush1.msra.mxu0 %v230
    %257 = vmatprep.subr.mxu0 0.0
    %258 = vmatpush1.msra.mxu0 %v231
    %259 = vmatprep.subr.mxu0 0.0
    %260 = vmatpush1.msra.mxu0 %v232
    %261 = vmatprep.subr.mxu0 0.0
    %262 = vmatpush1.msra.mxu0 %v233
    %263 = vmatprep.subr.mxu0 0.0
    %264 = vmatpush1.msra.mxu0 %v234
    %265 = vmatprep.subr.mxu0 0.0
    %266 = vmatpush1.msra.mxu0 %v235
    %267 = vmatprep.subr.mxu0 0.0
    %268 = vmatpush1.msra.mxu0 %v236
    %269 = vmatprep.subr.mxu0 0.0
    %270 = vmatpush1.msra.mxu0 0.0
    %271 = vmatprep.subr.mxu0 0.0
    %272 = vmatpush1.msra.mxu0 0.0
    %273 = vmatprep.subr.mxu0 0.0
    %274 = vmatpush1.msra.mxu0 0.0
    %275 = vmatprep.subr.mxu0 0.0
    %276 = vmatpush1.msra.mxu0 0.0
    %277 = vmatprep.subr.mxu0 0.0
    %278 = vmatpush1.msra.mxu0 0.0
    %279 = vmatprep.subr.mxu0 0.0
    %280 = vmatpush1.msra.mxu0 0.0
    %281 = vmatprep.subr.mxu0 0.0
    %282 = vmatpush1.msra.mxu0 0.0
    %283 = vmatprep.subr.mxu0 0.0
    %284 = vmatpush1.msra.mxu0 0.0
    %285 = vmatprep.subr.mxu0 0.0
    %286 = vmatpush1.msra.mxu0 0.0
    %287 = vmatprep.subr.mxu0 0.0
    %288 = vmatpush1.msra.mxu0 0.0
    %289 = vmatprep.subr.mxu0 0.0
    %290 = vmatpush1.msra.mxu0 0.0
    %291 = vmatprep.subr.mxu0 0.0
    %292 = vmatpush1.msra.mxu0 0.0
    %293 = vmatprep.subr.mxu0 0.0
    %294 = vmatpush1.msra.mxu0 0.0
    %295 = vmatprep.subr.mxu0 0.0
    %296 = vmatpush1.msra.mxu0 0.0
    %297 = vmatprep.subr.mxu0 0.0
    %298 = vmatpush1.msra.mxu0 0.0
    %299 = vmatprep.subr.mxu0 0.0
    %300 = vmatpush1.msra.mxu0 0.0
    %301 = vmatprep.mubr.f32.mxu0 0.0
    %302 = vmatmul.mubr.f32.gmra.mrb[0].mxu0 %v219
    %v303 = vpop.f32.mrb[0].mxu0
    %v304 = vadd.f32 0.0, %v303
    %v305 = vpop.f32.mrb[0].mxu0
    %306 = vmatprep.mubr.f32.mxu0 0.0
    %307 = vmatmul.mubr.f32.gmra.mrb[0].mxu0 %v220
    %v308 = vpop.f32.mrb[0].mxu0
    %v309 = vadd.f32 0.0, %v308
    %v310 = vpop.f32.mrb[0].mxu0
    %311 = vdwg.mxu0
    %v312 = vmul.f32 %v219, %v219
    %v313 = vmul.f32 %v220, %v220
    %314 = vmatprep.subr.mxu0 0.0
    %315 = vmatpush1.msra.mxu0 %v221
    %316 = vmatprep.subr.mxu0 0.0
    %317 = vmatpush1.msra.mxu0 %v222
    %318 = vmatprep.subr.mxu0 0.0
    %319 = vmatpush1.msra.mxu0 %v223
    %320 = vmatprep.subr.mxu0 0.0
    %321 = vmatpush1.msra.mxu0 %v224
    %322 = vmatprep.subr.mxu0 0.0
    %323 = vmatpush1.msra.mxu0 %v225
    %324 = vmatprep.subr.mxu0 0.0
    %325 = vmatpush1.msra.mxu0 %v226
    %326 = vmatprep.subr.mxu0 0.0
    %327 = vmatpush1.msra.mxu0 %v227
    %328 = vmatprep.subr.mxu0 0.0
    %329 = vmatpush1.msra.mxu0 %v228
    %330 = vmatprep.subr.mxu0 0.0
    %331 = vmatpush1.msra.mxu0 %v229
    %332 = vmatprep.subr.mxu0 0.0
    %333 = vmatpush1.msra.mxu0 %v230
    %334 = vmatprep.subr.mxu0 0.0
    %335 = vmatpush1.msra.mxu0 %v231
    %336 = vmatprep.subr.mxu0 0.0
    %337 = vmatpush1.msra.mxu0 %v232
    %338 = vmatprep.subr.mxu0 0.0
    %339 = vmatpush1.msra.mxu0 %v233
    %340 = vmatprep.subr.mxu0 0.0
    %341 = vmatpush1.msra.mxu0 %v234
    %342 = vmatprep.subr.mxu0 0.0
    %343 = vmatpush1.msra.mxu0 %v235
    %344 = vmatprep.subr.mxu0 0.0
    %345 = vmatpush1.msra.mxu0 %v236
    %346 = vmatprep.subr.mxu0 0.0
    %347 = vmatpush1.msra.mxu0 0.0
    %348 = vmatprep.subr.mxu0 0.0
    %349 = vmatpush1.msra.mxu0 0.0
    %350 = vmatprep.subr.mxu0 0.0
    %351 = vmatpush1.msra.mxu0 0.0
    %352 = vmatprep.subr.mxu0 0.0
    %353 = vmatpush1.msra.mxu0 0.0
    %354 = vmatprep.subr.mxu0 0.0
    %355 = vmatpush1.msra.mxu0 0.0
    %356 = vmatprep.subr.mxu0 0.0
    %357 = vmatpush1.msra.mxu0 0.0
    %358 = vmatprep.subr.mxu0 0.0
    %359 = vmatpush1.msra.mxu0 0.0
    %360 = vmatprep.subr.mxu0 0.0
    %361 = vmatpush1.msra.mxu0 0.0
    %362 = vmatprep.subr.mxu0 0.0
    %363 = vmatpush1.msra.mxu0 0.0
    %364 = vmatprep.subr.mxu0 0.0
    %365 = vmatpush1.msra.mxu0 0.0
    %366 = vmatprep.subr.mxu0 0.0
    %367 = vmatpush1.msra.mxu0 0.0
    %368 = vmatprep.subr.mxu0 0.0
    %369 = vmatpush1.msra.mxu0 0.0
    %370 = vmatprep.subr.mxu0 0.0
    %371 = vmatpush1.msra.mxu0 0.0
    %372 = vmatprep.subr.mxu0 0.0
    %373 = vmatpush1.msra.mxu0 0.0
    %374 = vmatprep.subr.mxu0 0.0
    %375 = vmatpush1.msra.mxu0 0.0
    %376 = vmatprep.subr.mxu0 0.0
    %377 = vmatpush1.msra.mxu0 0.0
    %378 = vmatprep.mubr.f32.mxu0 0.0
    %379 = vmatmul.mubr.f32.gmra.mrb[0].mxu0 %v312
    %v380 = vpop.f32.mrb[0].mxu0
    %v381 = vadd.f32 0.0, %v380
    %v382 = vpop.f32.mrb[0].mxu0
    %383 = vmatprep.mubr.f32.mxu0 0.0
    %384 = vmatmul.mubr.f32.gmra.mrb[0].mxu0 %v313
    %v385 = vpop.f32.mrb[0].mxu0
    %v386 = vadd.f32 0.0, %v385
    %v387 = vpop.f32.mrb[0].mxu0
    %388 = vdwg.mxu0
    %v389 = vmul.f32 %v304, %v304
    %v390 = vmul.f32 %v309, %v309
    %v391 = vsub.f32 %v381, %v389
    %v392 = vsub.f32 %v386, %v390
    %v393 = vmax.f32 %v391, 0.0
    %v394 = vmax.f32 %v392, 0.0
    %v395 = vsub.f32 %v219, %v304
    %v396 = vsub.f32 %v220, %v309
    %v397 = vadd.f32 %v393, 1e-05
    %v398 = vadd.f32 %v394, 1e-05
    %v399 = vrsqrt.pop %v397
    %v400 = vrsqrt.pop %v398
    %v401 = vmul.f32 %v395, %v399
    %v402 = vmul.f32 %v396, %v400
    %v403 = vld [vmem:[%s4] sm:$0x1]
    %v405 = vlaneseq
    %v406 = vshrl.u32 %v405, 7
    %v407 = vsub.s32 0, %v406
    %v408 = vrot.slane %v403, %v407
    %v410 = vmul.f32 %v401, %v408
    %v411 = vmul.f32 %v402, %v408
    %v412 = vld [vmem:[%s5] sm:$0x1]
    %v414 = vlaneseq
    %v415 = vshrl.u32 %v414, 7
    %v416 = vsub.s32 0, %v415
    %v417 = vrot.slane %v412, %v416
    %v419 = vadd.f32 %v410, %v417
    %v420 = vadd.f32 %v411, %v417
    %421 = vst [vmem:[#allocation8] sm:$0xff] %v419
    %422 = vst [vmem:[#allocation8 + $0x8] sm:$0xff] %v420
    // Predicated region
    $region38: #{tpu_custom_call.1} parent=1 // pred_check
      _
    $region39: #{tpu_custom_call.1} parent=1 // pred_check_branch
      %424 = sbr.rel (0) target = $region41
    $region40: #{tpu_custom_call.1} parent=1 // pred_region
      %s426 = ssub.s32 256, 256
      %427 = vsyncadd [#allocation4], %s426
      %s428 = sshll.u32 [#allocation8], 4
      %s429 = int_to_ptr.vmem [resolvable:$true] %s428
      %434 = dma.vmem_to_hbm [thread:$0]  %s429, 256, %s6, [#allocation4], 128, 128, 8
    $region41: #{tpu_custom_call.1} parent=1 // pred_fallthru
      _
    // Predicated region
    $region42: #{tpu_custom_call.1} parent=1 // pred_check
      _
    $region43: #{tpu_custom_call.1} parent=1 // pred_check_branch
      %436 = sbr.rel (0) target = $region45
    $region44: #{tpu_custom_call.1} parent=1 // pred_region
      %437 = dma.done [#allocation4], 256
    $region45: #{tpu_custom_call.1} parent=1 // pred_fallthru
      _
    %438 = vsyncpa [#allocation3], 1
    %439 = vsyncpa [#allocation6], 1
    %440 = vsyncpa [#allocation4], 1

</llo_original>
